<compile_context>
chip_gen: v6e
topology: v6e:2x2x1
jax: 0.10.0
libtpu: 0.0.40
codegen_flags: <defaults>
</compile_context>

<pallas_src>
import functools

import jax
import jax.numpy as jnp
from jax.experimental import pallas as pl
from jax.experimental.pallas import tpu as pltpu

_LANE = 128
_SUBLANE = 8


def _round_up(x, m):
    return ((x + m - 1) // m) * m


def _actor_kernel(log_std_min, log_std_max, a_pad,
                  obs_ref, w1_ref, b1_ref, w2_ref, b2_ref, w3_ref, b3_ref,
                  out_ref):
    # f_layer: Linear + ReLU  (bf16 MXU feed, f32 accumulate)
    x = obs_ref[...].astype(jnp.bfloat16)
    h = jnp.dot(x, w1_ref[...], preferred_element_type=jnp.float32)
    h = jnp.maximum(h + b1_ref[...], 0.0)

    # trunk[0:2]: Linear + ReLU
    h = jnp.dot(h.astype(jnp.bfloat16), w2_ref[...],
                preferred_element_type=jnp.float32)
    h = jnp.maximum(h + b2_ref[...], 0.0)

    # trunk[2]: fused mu / log_std head — one MXU pass over [H, 2*Ap]
    heads = jnp.dot(h.astype(jnp.bfloat16), w3_ref[...],
                    preferred_element_type=jnp.float32) + b3_ref[...]
    mu = heads[:, :a_pad]
    log_std = heads[:, a_pad:]

    # squash log_std into [log_std_min, log_std_max]   (f32 EUP epilogue)
    log_std = jnp.tanh(log_std)
    log_std = log_std_min + 0.5 * (log_std_max - log_std_min) * (log_std + 1.0)
    std = jnp.exp(log_std)

    # lane-dense output slab: [ mu | std | tanh(mu) ], each 128-aligned
    out_ref[:, 0:a_pad] = mu
    out_ref[:, a_pad:2 * a_pad] = std
    out_ref[:, 2 * a_pad:3 * a_pad] = jnp.tanh(mu)   # SquashedNormal(mu, std).mean


def diag_gaussian_actor(obs, params, log_std_bounds):
    """Returns (mu, std, dist_mean) of SquashedNormal(mu, std)."""
    w1, b1, w2, b2, w3, b3 = params
    B, obs_dim = obs.shape
    hidden = w1.shape[1]
    A = w3.shape[1] // 2
    lo, hi = log_std_bounds

    # ---- pad feature dims to lane multiples, batch to a sublane-aligned tile ----
    Dp = _round_up(obs_dim, _LANE)
    Hp = _round_up(hidden, _LANE)
    Ap = _round_up(A, _LANE)
    TM = min(128, _round_up(B, _SUBLANE))   # batch tile (small VMEM footprint on v7x)
    Bp = _round_up(B, TM)

    f32, bf16 = jnp.float32, jnp.bfloat16
    obs_p = jnp.zeros((Bp, Dp), f32).at[:B, :obs_dim].set(obs.astype(f32))
    w1_p = jnp.zeros((Dp, Hp), bf16).at[:obs_dim, :hidden].set(w1.astype(bf16))
    b1_p = jnp.zeros((1, Hp), f32).at[:, :hidden].set(b1.astype(f32))
    w2_p = jnp.zeros((Hp, Hp), bf16).at[:hidden, :hidden].set(w2.astype(bf16))
    b2_p = jnp.zeros((1, Hp), f32).at[:, :hidden].set(b2.astype(f32))
    w3_p = jnp.zeros((Hp, 2 * Ap), bf16)
    w3_p = w3_p.at[:hidden, :A].set(w3[:, :A].astype(bf16))
    w3_p = w3_p.at[:hidden, Ap:Ap + A].set(w3[:, A:].astype(bf16))
    b3_p = jnp.zeros((1, 2 * Ap), f32)
    b3_p = b3_p.at[:, :A].set(b3[:, :A].astype(f32))
    b3_p = b3_p.at[:, Ap:Ap + A].set(b3[:, A:].astype(f32))

    grid = (Bp // TM,)
    kernel = functools.partial(_actor_kernel, float(lo), float(hi), Ap)

    # weights/biases: constant block index -> VMEM-resident, DMA'd once.
    resident = lambda shape: pl.BlockSpec(shape, lambda i: (0, 0))

    flops = 2 * Bp * (Dp * Hp + Hp * Hp + Hp * 2 * Ap)
    transcendentals = Bp * 3 * Ap  # tanh(log_std), exp, tanh(mu)
    bytes_accessed = (obs_p.size * 4 + w1_p.size * 2 + b1_p.size * 4 +
                      w2_p.size * 2 + b2_p.size * 4 + w3_p.size * 2 +
                      b3_p.size * 4 + Bp * 3 * Ap * 4)

    out = pl.pallas_call(
        kernel,
        out_shape=jax.ShapeDtypeStruct((Bp, 3 * Ap), jnp.float32),
        grid=grid,
        in_specs=[
            pl.BlockSpec((TM, Dp), lambda i: (i, 0)),   # obs: tiled over batch
            resident((Dp, Hp)),                         # W1
            resident((1, Hp)),                          # b1
            resident((Hp, Hp)),                         # W2
            resident((1, Hp)),                          # b2
            resident((Hp, 2 * Ap)),                     # W3 (fused heads)
            resident((1, 2 * Ap)),                      # b3
        ],
        out_specs=pl.BlockSpec((TM, 3 * Ap), lambda i: (i, 0)),
        compiler_params=pltpu.CompilerParams(
            dimension_semantics=("parallel",),
            vmem_limit_bytes=32 * 1024 * 1024,
        ),
        cost_estimate=pl.CostEstimate(
            flops=flops,
            transcendentals=transcendentals,
            bytes_accessed=bytes_accessed,
        ),
    )(obs_p, w1_p, b1_p, w2_p, b2_p, w3_p, b3_p)

    mu = out[:B, 0:A]
    std = out[:B, Ap:Ap + A]
    mean = out[:B, 2 * Ap:2 * Ap + A]
    return mu, std, mean


def init_params(key, obs_dim, hidden_dim, action_dim):
    """Deterministic synthetic init (module uses orthogonal weight_init;
    here we use scaled normal draws — shapes match the nn.Linear stack)."""
    ks = jax.random.split(key, 4)
    scale = lambda fan_in: 1.0 / jnp.sqrt(fan_in)
    w1 = jax.random.normal(ks[0], (obs_dim, hidden_dim), jnp.float32) * scale(obs_dim)
    b1 = jnp.zeros((1, hidden_dim), jnp.float32)
    w2 = jax.random.normal(ks[1], (hidden_dim, hidden_dim), jnp.float32) * scale(hidden_dim)
    b2 = jnp.zeros((1, hidden_dim), jnp.float32)
    w3 = jax.random.normal(ks[2], (hidden_dim, 2 * action_dim), jnp.float32) * scale(hidden_dim)
    b3 = jax.random.normal(ks[3], (1, 2 * action_dim), jnp.float32) * 0.1
    return (w1, b1, w2, b2, w3, b3)


def reference(obs, params, log_std_bounds):
    """Pure-JAX reference with the same bf16-feed / f32-accumulate numerics."""
    w1, b1, w2, b2, w3, b3 = params
    lo, hi = log_std_bounds
    bf16, f32 = jnp.bfloat16, jnp.float32
    A = w3.shape[1] // 2
    h = jnp.dot(obs.astype(bf16), w1.astype(bf16), preferred_element_type=f32)
    h = jnp.maximum(h + b1, 0.0)
    h = jnp.dot(h.astype(bf16), w2.astype(bf16), preferred_element_type=f32)
    h = jnp.maximum(h + b2, 0.0)
    heads = jnp.dot(h.astype(bf16), w3.astype(bf16), preferred_element_type=f32) + b3
    mu, log_std = heads[:, :A], heads[:, A:]
    log_std = jnp.tanh(log_std)
    log_std = lo + 0.5 * (hi - lo) * (log_std + 1.0)
    return mu, jnp.exp(log_std), jnp.tanh(mu)


if __name__ == "__main__":
    B, OBS_DIM, HIDDEN, ACTION_DIM = 8, 32, 32, 4
    LOG_STD_BOUNDS = (-5.0, 2.0)

    key = jax.random.PRNGKey(0)
    k_obs, k_par = jax.random.split(key)
    obs = jax.random.normal(k_obs, (B, OBS_DIM), jnp.float32)
    params = init_params(k_par, OBS_DIM, HIDDEN, ACTION_DIM)

    mu, std, mean = diag_gaussian_actor(obs, params, LOG_STD_BOUNDS)
    jax.block_until_ready((mu, std, mean))

    mu_r, std_r, mean_r = reference(obs, params, LOG_STD_BOUNDS)
    assert jnp.allclose(mu, mu_r, atol=1e-3, rtol=1e-3), "mu mismatch"
    assert jnp.allclose(std, std_r, atol=1e-3, rtol=1e-3), "std mismatch"
    assert jnp.allclose(mean, mean_r, atol=1e-3, rtol=1e-3), "mean mismatch"

    # TODO(synk): the torch module returns a SquashedNormal distribution object
    # (rsample/log_prob); here we return its parameters (mu, std) and dist.mean = tanh(mu).
    print("KERNEL_OK")
</pallas_src>

<mosaic_0001>
module attributes {stable_mosaic.version = 11 : i64} {
  func.func @_actor_kernel(%arg0: i32, %arg1: memref<8x128xf32, #tpu.memory_space<vmem>>, %arg2: memref<128x128xbf16, #tpu.memory_space<vmem>>, %arg3: memref<1x128xf32, #tpu.memory_space<vmem>>, %arg4: memref<128x128xbf16, #tpu.memory_space<vmem>>, %arg5: memref<1x128xf32, #tpu.memory_space<vmem>>, %arg6: memref<128x256xbf16, #tpu.memory_space<vmem>>, %arg7: memref<1x256xf32, #tpu.memory_space<vmem>>, %arg8: memref<8x384xf32, #tpu.memory_space<vmem>>) attributes {dimension_semantics = [#tpu.dimension_semantics<parallel>], iteration_bounds = array<i64: 1>, scalar_prefetch = 0 : i64, scratch_operands = 0 : i64, tpu.core_type = #tpu.core_type<tc>, window_params = [{transform_indices = @transform_0, window_bounds = array<i64: 8, 128>}, {pipeline_mode = #tpu.pipeline_mode<synchronous>, transform_indices = @transform_1, window_bounds = array<i64: 128, 128>}, {pipeline_mode = #tpu.pipeline_mode<synchronous>, transform_indices = @transform_2, window_bounds = array<i64: 1, 128>}, {pipeline_mode = #tpu.pipeline_mode<synchronous>, transform_indices = @transform_3, window_bounds = array<i64: 128, 128>}, {pipeline_mode = #tpu.pipeline_mode<synchronous>, transform_indices = @transform_4, window_bounds = array<i64: 1, 128>}, {pipeline_mode = #tpu.pipeline_mode<synchronous>, transform_indices = @transform_5, window_bounds = array<i64: 128, 256>}, {pipeline_mode = #tpu.pipeline_mode<synchronous>, transform_indices = @transform_6, window_bounds = array<i64: 1, 256>}, {transform_indices = @transform_7, window_bounds = array<i64: 8, 384>}]} {
    %c0 = arith.constant 0 : index
    %c0_0 = arith.constant 0 : index
    %0 = vector.load %arg1[%c0, %c0_0] : memref<8x128xf32, #tpu.memory_space<vmem>>, vector<8x128xf32>
    %1 = arith.truncf %0 : vector<8x128xf32> to vector<8x128xbf16>
    %c0_1 = arith.constant 0 : index
    %c0_2 = arith.constant 0 : index
    %2 = vector.load %arg2[%c0_1, %c0_2] : memref<128x128xbf16, #tpu.memory_space<vmem>>, vector<128x128xbf16>
    %cst = arith.constant dense<0.000000e+00> : vector<8x128xf32>
    %3 = tpu.matmul %1, %2, %cst {dimension_numbers = #tpu.dot_dimension_numbers<[1], [0], [0], [1], [0, 0, 1, 1], [], []>} : vector<8x128xbf16>, vector<128x128xbf16>, vector<8x128xf32> -> vector<8x128xf32>
    %c0_3 = arith.constant 0 : index
    %c0_4 = arith.constant 0 : index
    %4 = vector.load %arg3[%c0_3, %c0_4] : memref<1x128xf32, #tpu.memory_space<vmem>>, vector<1x128xf32>
    %5 = vector.broadcast %4 : vector<1x128xf32> to vector<8x128xf32>
    %6 = arith.addf %3, %5 : vector<8x128xf32>
    %cst_5 = arith.constant 0.000000e+00 : f32
    %7 = vector.broadcast %cst_5 : f32 to vector<8x128xf32>
    %8 = arith.maximumf %6, %7 : vector<8x128xf32>
    %9 = arith.truncf %8 : vector<8x128xf32> to vector<8x128xbf16>
    %c0_6 = arith.constant 0 : index
    %c0_7 = arith.constant 0 : index
    %10 = vector.load %arg4[%c0_6, %c0_7] : memref<128x128xbf16, #tpu.memory_space<vmem>>, vector<128x128xbf16>
    %cst_8 = arith.constant dense<0.000000e+00> : vector<8x128xf32>
    %11 = tpu.matmul %9, %10, %cst_8 {dimension_numbers = #tpu.dot_dimension_numbers<[1], [0], [0], [1], [0, 0, 1, 1], [], []>} : vector<8x128xbf16>, vector<128x128xbf16>, vector<8x128xf32> -> vector<8x128xf32>
    %c0_9 = arith.constant 0 : index
    %c0_10 = arith.constant 0 : index
    %12 = vector.load %arg5[%c0_9, %c0_10] : memref<1x128xf32, #tpu.memory_space<vmem>>, vector<1x128xf32>
    %13 = vector.broadcast %12 : vector<1x128xf32> to vector<8x128xf32>
    %14 = arith.addf %11, %13 : vector<8x128xf32>
    %cst_11 = arith.constant 0.000000e+00 : f32
    %15 = vector.broadcast %cst_11 : f32 to vector<8x128xf32>
    %16 = arith.maximumf %14, %15 : vector<8x128xf32>
    %17 = arith.truncf %16 : vector<8x128xf32> to vector<8x128xbf16>
    %c0_12 = arith.constant 0 : index
    %c0_13 = arith.constant 0 : index
    %18 = vector.load %arg6[%c0_12, %c0_13] : memref<128x256xbf16, #tpu.memory_space<vmem>>, vector<128x256xbf16>
    %cst_14 = arith.constant dense<0.000000e+00> : vector<8x256xf32>
    %19 = tpu.matmul %17, %18, %cst_14 {dimension_numbers = #tpu.dot_dimension_numbers<[1], [0], [0], [1], [0, 0, 1, 1], [], []>} : vector<8x128xbf16>, vector<128x256xbf16>, vector<8x256xf32> -> vector<8x256xf32>
    %c0_15 = arith.constant 0 : index
    %c0_16 = arith.constant 0 : index
    %20 = vector.load %arg7[%c0_15, %c0_16] : memref<1x256xf32, #tpu.memory_space<vmem>>, vector<1x256xf32>
    %21 = vector.broadcast %20 : vector<1x256xf32> to vector<8x256xf32>
    %22 = arith.addf %19, %21 : vector<8x256xf32>
    %23 = vector.extract_strided_slice %22 {offsets = [0, 0], sizes = [8, 128], strides = [1, 1]} : vector<8x256xf32> to vector<8x128xf32>
    %24 = vector.extract_strided_slice %22 {offsets = [0, 128], sizes = [8, 128], strides = [1, 1]} : vector<8x256xf32> to vector<8x128xf32>
    %25 = math.tanh %24 : vector<8x128xf32>
    %cst_17 = arith.constant 1.000000e+00 : f32
    %26 = vector.broadcast %cst_17 : f32 to vector<8x128xf32>
    %27 = arith.addf %25, %26 : vector<8x128xf32>
    %cst_18 = arith.constant 3.500000e+00 : f32
    %28 = vector.broadcast %cst_18 : f32 to vector<8x128xf32>
    %29 = arith.mulf %28, %27 : vector<8x128xf32>
    %cst_19 = arith.constant -5.000000e+00 : f32
    %30 = vector.broadcast %cst_19 : f32 to vector<8x128xf32>
    %31 = arith.addf %30, %29 : vector<8x128xf32>
    %32 = math.exp %31 : vector<8x128xf32>
    %c0_20 = arith.constant 0 : index
    %c0_21 = arith.constant 0 : index
    %33 = vector.load %arg8[%c0_20, %c0_21] : memref<8x384xf32, #tpu.memory_space<vmem>>, vector<8x128xf32>
    tpu.vector_store %arg8[%c0_20, %c0_21], %23 {strides = array<i32>} : memref<8x384xf32, #tpu.memory_space<vmem>>, vector<8x128xf32>,
    %c0_22 = arith.constant 0 : index
    %c128 = arith.constant 128 : index
    %34 = vector.load %arg8[%c0_22, %c128] : memref<8x384xf32, #tpu.memory_space<vmem>>, vector<8x128xf32>
    tpu.vector_store %arg8[%c0_22, %c128], %32 {strides = array<i32>} : memref<8x384xf32, #tpu.memory_space<vmem>>, vector<8x128xf32>,
    %35 = math.tanh %23 : vector<8x128xf32>
    %c0_23 = arith.constant 0 : index
    %c256 = arith.constant 256 : index
    %36 = vector.load %arg8[%c0_23, %c256] : memref<8x384xf32, #tpu.memory_space<vmem>>, vector<8x128xf32>
    tpu.vector_store %arg8[%c0_23, %c256], %35 {strides = array<i32>} : memref<8x384xf32, #tpu.memory_space<vmem>>, vector<8x128xf32>,
    return
  }
  func.func @transform_0(%arg0: i32) -> (i32, i32) {
    %c0_i32 = arith.constant 0 : i32
    %c0_i32_0 = arith.constant 0 : i32
    return %arg0, %c0_i32 : i32, i32
  }
  func.func @transform_1(%arg0: i32) -> (i32, i32) {
    %c0_i32 = arith.constant 0 : i32
    %c0_i32_0 = arith.constant 0 : i32
    %c0_i32_1 = arith.constant 0 : i32
    return %c0_i32, %c0_i32_0 : i32, i32
  }
  func.func @transform_2(%arg0: i32) -> (i32, i32) {
    %c0_i32 = arith.constant 0 : i32
    %c0_i32_0 = arith.constant 0 : i32
    %c0_i32_1 = arith.constant 0 : i32
    return %c0_i32, %c0_i32_0 : i32, i32
  }
  func.func @transform_3(%arg0: i32) -> (i32, i32) {
    %c0_i32 = arith.constant 0 : i32
    %c0_i32_0 = arith.constant 0 : i32
    %c0_i32_1 = arith.constant 0 : i32
    return %c0_i32, %c0_i32_0 : i32, i32
  }
  func.func @transform_4(%arg0: i32) -> (i32, i32) {
    %c0_i32 = arith.constant 0 : i32
    %c0_i32_0 = arith.constant 0 : i32
    %c0_i32_1 = arith.constant 0 : i32
    return %c0_i32, %c0_i32_0 : i32, i32
  }
  func.func @transform_5(%arg0: i32) -> (i32, i32) {
    %c0_i32 = arith.constant 0 : i32
    %c0_i32_0 = arith.constant 0 : i32
    %c0_i32_1 = arith.constant 0 : i32
    return %c0_i32, %c0_i32_0 : i32, i32
  }
  func.func @transform_6(%arg0: i32) -> (i32, i32) {
    %c0_i32 = arith.constant 0 : i32
    %c0_i32_0 = arith.constant 0 : i32
    %c0_i32_1 = arith.constant 0 : i32
    return %c0_i32, %c0_i32_0 : i32, i32
  }
  func.func @transform_7(%arg0: i32) -> (i32, i32) {
    %c0_i32 = arith.constant 0 : i32
    %c0_i32_0 = arith.constant 0 : i32
    return %arg0, %c0_i32 : i32, i32
  }
}

</mosaic_0001>

<llo_original>
// kernel: tpu_custom_call.1
$region0: #{tpu_custom_call.1}
  #allocation0 [shape = 'u32[]', space=smem, size = 0x4, offset = 0x4, fixed_abs, tag = 'smem constant byte address 0x4 - core index']
  #allocation1 [shape = 'u32[144,128]{1,0:T(1,128)}', space=vmem, size = 0x12000, scoped, tag = 'internal scratch']
  %s0 = inlined_call_operand.hbm [shape: f32[8,128], index: 0, kind: input, shape index: {}]
  %s1 = inlined_call_operand.hbm [shape: bf16[128,128], index: 1, kind: input, shape index: {}]
  %s2 = inlined_call_operand.vmem [shape: f32[1,128], index: 2, kind: input, shape index: {}]
  %s3 = inlined_call_operand.hbm [shape: bf16[128,128], index: 3, kind: input, shape index: {}]
  %s4 = inlined_call_operand.vmem [shape: f32[1,128], index: 4, kind: input, shape index: {}]
  %s5 = inlined_call_operand.hbm [shape: bf16[128,256], index: 5, kind: input, shape index: {}]
  %s6 = inlined_call_operand.vmem [shape: f32[1,256], index: 6, kind: input, shape index: {}]
  %s7 = inlined_call_operand.hbm [shape: f32[8,384], index: 7, kind: output, shape index: {}]
  %s8 = sld [smem:[#allocation0]]
  $region54: #{tpu_custom_call.1} parent=0
    _
  %s10 = ssub.s32 1, %s8
  %s11 = scalar_select 0, %s10, %s8
  $region1: #{tpu_custom_call.1} parent=0
    #allocation2 [shape = 'u8[4096]{0}', space=vmem, size = 0x1000, scoped, tag = 'input window, operand 0, single buffered']
    #allocation3 [shape = 's32[1]{0}', space=sflag, size = 0x4, scoped, tag = 'scoped memory for tpu_custom_call.1']
    #allocation4 [shape = 's32[1]{0}', space=sflag, size = 0x4, scoped, tag = 'scoped memory for tpu_custom_call.1']
    #allocation5 [shape = 'u8[32768]{0}', space=vmem, size = 0x8000, scoped, tag = 'input window, operand 1, single buffered']
    #allocation6 [shape = 's32[1]{0}', space=sflag, size = 0x4, scoped, tag = 'scoped memory for tpu_custom_call.1']
    #allocation7 [shape = 'u8[32768]{0}', space=vmem, size = 0x8000, scoped, tag = 'input window, operand 3, single buffered']
    #allocation8 [shape = 'u8[65536]{0}', space=vmem, size = 0x10000, scoped, tag = 'input window, operand 5, single buffered']
    #allocation9 [shape = 's32[1]{0}', space=sflag, size = 0x4, scoped, tag = 'scoped memory for tpu_custom_call.1']
    #allocation10 [shape = 'u8[12288]{0}', space=vmem, size = 0x3000, scoped, tag = 'output window, operand 0, single buffered']
    %12 = vsyncpa [#allocation3], 0
    %13 = vsyncpa [#allocation6], 0
    %14 = vsyncpa [#allocation9], 0
    %15 = vsyncpa [#allocation4], 0
    // Predicated region
    $region2: #{tpu_custom_call.1} parent=1 // pred_check
      _
    $region3: #{tpu_custom_call.1} parent=1 // pred_check_branch
      %17 = sbr.rel (0) target = $region5
    $region4: #{tpu_custom_call.1} parent=1 // pred_region
      %s19 = ssub.s32 128, 128
      %20 = vsyncadd [#allocation3], %s19
      %s22 = sshll.u32 [#allocation2], 4
      %s23 = int_to_ptr.vmem [resolvable:$true] %s22
      %25 = dma.hbm_to_vmem [thread:$0]  %s0, 128, %s23, [#allocation3]
    $region5: #{tpu_custom_call.1} parent=1 // pred_fallthru
      _
    // Predicated region
    $region6: #{tpu_custom_call.1} parent=1 // pred_check
      _
    $region7: #{tpu_custom_call.1} parent=1 // pred_check_branch
      %27 = sbr.rel (0) target = $region9
    $region8: #{tpu_custom_call.1} parent=1 // pred_region
      %s29 = ssub.s32 1024, 1024
      %30 = vsyncadd [#allocation6], %s29
      %s31 = sshll.u32 [#allocation5], 4
      %s32 = int_to_ptr.vmem [resolvable:$true] %s31
      %37 = dma.hbm_to_vmem [thread:$0]  %s1, 1024, %s32, [#allocation6], 64, 64, 4
    $region9: #{tpu_custom_call.1} parent=1 // pred_fallthru
      _
    // Predicated region
    $region10: #{tpu_custom_call.1} parent=1 // pred_check
      _
    $region11: #{tpu_custom_call.1} parent=1 // pred_check_branch
      %39 = sbr.rel (0) target = $region13
    $region12: #{tpu_custom_call.1} parent=1 // pred_region
      _
    $region13: #{tpu_custom_call.1} parent=1 // pred_fallthru
      _
    // Predicated region
    $region14: #{tpu_custom_call.1} parent=1 // pred_check
      _
    $region15: #{tpu_custom_call.1} parent=1 // pred_check_branch
      %41 = sbr.rel (0) target = $region17
    $region16: #{tpu_custom_call.1} parent=1 // pred_region
      %s43 = ssub.s32 1024, 1024
      %44 = vsyncadd [#allocation6], %s43
      %s45 = sshll.u32 [#allocation7], 4
      %s46 = int_to_ptr.vmem [resolvable:$true] %s45
      %51 = dma.hbm_to_vmem [thread:$0]  %s3, 1024, %s46, [#allocation6], 64, 64, 4
    $region17: #{tpu_custom_call.1} parent=1 // pred_fallthru
      _
    // Predicated region
    $region18: #{tpu_custom_call.1} parent=1 // pred_check
      _
    $region19: #{tpu_custom_call.1} parent=1 // pred_check_branch
      %53 = sbr.rel (0) target = $region21
    $region20: #{tpu_custom_call.1} parent=1 // pred_region
      _
    $region21: #{tpu_custom_call.1} parent=1 // pred_fallthru
      _
    // Predicated region
    $region22: #{tpu_custom_call.1} parent=1 // pred_check
      _
    $region23: #{tpu_custom_call.1} parent=1 // pred_check_branch
      %55 = sbr.rel (0) target = $region25
    $region24: #{tpu_custom_call.1} parent=1 // pred_region
      %s57 = ssub.s32 2048, 2048
      %58 = vsyncadd [#allocation9], %s57
      %s59 = sshll.u32 [#allocation8], 4
      %s60 = int_to_ptr.vmem [resolvable:$true] %s59
      %65 = dma.hbm_to_vmem [thread:$0]  %s5, 2048, %s60, [#allocation9], 128, 128, 8
    $region25: #{tpu_custom_call.1} parent=1 // pred_fallthru
      _
    // Predicated region
    $region26: #{tpu_custom_call.1} parent=1 // pred_check
      _
    $region27: #{tpu_custom_call.1} parent=1 // pred_check_branch
      %67 = sbr.rel (0) target = $region29
    $region28: #{tpu_custom_call.1} parent=1 // pred_region
      _
    $region29: #{tpu_custom_call.1} parent=1 // pred_fallthru
      _
    // Predicated region
    $region30: #{tpu_custom_call.1} parent=1 // pred_check
      _
    $region31: #{tpu_custom_call.1} parent=1 // pred_check_branch
      %69 = sbr.rel (0) target = $region33
    $region32: #{tpu_custom_call.1} parent=1 // pred_region
      %70 = dma.done [#allocation3], 128
    $region33: #{tpu_custom_call.1} parent=1 // pred_fallthru
      _
    // Predicated region
    $region34: #{tpu_custom_call.1} parent=1 // pred_check
      _
    $region35: #{tpu_custom_call.1} parent=1 // pred_check_branch
      %72 = sbr.rel (0) target = $region37
    $region36: #{tpu_custom_call.1} parent=1 // pred_region
      %73 = dma.done [#allocation6], 1024
    $region37: #{tpu_custom_call.1} parent=1 // pred_fallthru
      _
    // Predicated region
    $region38: #{tpu_custom_call.1} parent=1 // pred_check
      _
    $region39: #{tpu_custom_call.1} parent=1 // pred_check_branch
      %75 = sbr.rel (0) target = $region41
    $region40: #{tpu_custom_call.1} parent=1 // pred_region
      %76 = dma.done [#allocation6], 1024
    $region41: #{tpu_custom_call.1} parent=1 // pred_fallthru
      _
    // Predicated region
    $region42: #{tpu_custom_call.1} parent=1 // pred_check
      _
    $region43: #{tpu_custom_call.1} parent=1 // pred_check_branch
      %78 = sbr.rel (0) target = $region45
    $region44: #{tpu_custom_call.1} parent=1 // pred_region
      %79 = dma.done [#allocation9], 2048
    $region45: #{tpu_custom_call.1} parent=1 // pred_fallthru
      _
    %v81 = vld [vmem:[#allocation2] sm:$0xff]
    %v82 = vpack.c.bf16 %v81, %v81
    %v83 = vld [vmem:[#allocation5] sm:$0xf]
    %v84 = vld [vmem:[#allocation5 + $0x4] sm:$0xf]
    %v85 = vld [vmem:[#allocation5 + $0x8] sm:$0xf]
    %v86 = vld [vmem:[#allocation5 + $0xc] sm:$0xf]
    %v87 = vld [vmem:[#allocation5 + $0x10] sm:$0xf]
    %v88 = vld [vmem:[#allocation5 + $0x14] sm:$0xf]
    %v89 = vld [vmem:[#allocation5 + $0x18] sm:$0xf]
    %v90 = vld [vmem:[#allocation5 + $0x1c] sm:$0xf]
    %v91 = vld [vmem:[#allocation5 + $0x20] sm:$0xf]
    %v92 = vld [vmem:[#allocation5 + $0x24] sm:$0xf]
    %v93 = vld [vmem:[#allocation5 + $0x28] sm:$0xf]
    %v94 = vld [vmem:[#allocation5 + $0x2c] sm:$0xf]
    %v95 = vld [vmem:[#allocation5 + $0x30] sm:$0xf]
    %v96 = vld [vmem:[#allocation5 + $0x34] sm:$0xf]
    %v97 = vld [vmem:[#allocation5 + $0x38] sm:$0xf]
    %v98 = vld [vmem:[#allocation5 + $0x3c] sm:$0xf]
    %v99 = vld [vmem:[%s2] sm:$0x1]
    %v101 = vlaneseq
    %v102 = vshrl.u32 %v101, 7
    %v103 = vsub.s32 0, %v102
    %v104 = vrot.slane %v99, %v103
    %v122 = vunpack.c.l.b16 %v83
    %v123 = vunpack.c.l.b16 %v84
    %v124 = vunpack.c.l.b16 %v85
    %v125 = vunpack.c.l.b16 %v86
    %v126 = vunpack.c.l.b16 %v87
    %v127 = vunpack.c.l.b16 %v88
    %v128 = vunpack.c.l.b16 %v89
    %v129 = vunpack.c.l.b16 %v90
    %v130 = vunpack.c.l.b16 %v91
    %v131 = vunpack.c.l.b16 %v92
    %v132 = vunpack.c.l.b16 %v93
    %v133 = vunpack.c.l.b16 %v94
    %v134 = vunpack.c.l.b16 %v95
    %v135 = vunpack.c.l.b16 %v96
    %v136 = vunpack.c.l.b16 %v97
    %v137 = vunpack.c.l.b16 %v98
    %v138 = vpack.c.b16 %v123, %v122
    %v139 = vpack.c.b16 %v125, %v124
    %v140 = vpack.c.b16 %v127, %v126
    %v141 = vpack.c.b16 %v129, %v128
    %v142 = vpack.c.b16 %v131, %v130
    %v143 = vpack.c.b16 %v133, %v132
    %v144 = vpack.c.b16 %v135, %v134
    %v145 = vpack.c.b16 %v137, %v136
    %154 = vmatprep.subr.bf16.mxu0 0
    %155 = vmatpush1.bf16.msra.mxu0 %v145
    %156 = vmatprep.subr.bf16.mxu0 0
    %157 = vmatpush1.bf16.msra.mxu0 %v144
    %158 = vmatprep.subr.bf16.mxu0 0
    %159 = vmatpush1.bf16.msra.mxu0 %v143
    %160 = vmatprep.subr.bf16.mxu0 0
    %161 = vmatpush1.bf16.msra.mxu0 %v142
    %162 = vmatprep.subr.bf16.mxu0 0
    %163 = vmatpush1.bf16.msra.mxu0 %v141
    %164 = vmatprep.subr.bf16.mxu0 0
    %165 = vmatpush1.bf16.msra.mxu0 %v140
    %166 = vmatprep.subr.bf16.mxu0 0
    %167 = vmatpush1.bf16.msra.mxu0 %v139
    %168 = vmatprep.subr.bf16.mxu0 0
    %169 = vmatpush1.bf16.msra.mxu0 %v138
    %170 = vmatprep.subr.bf16.mxu0 0
    %171 = vmatpush2.bf16.msra.mxu0 0
    %172 = vmatprep.subr.bf16.mxu0 0
    %173 = vmatpush2.bf16.msra.mxu0 0
    %174 = vmatprep.subr.bf16.mxu0 0
    %175 = vmatpush2.bf16.msra.mxu0 0
    %176 = vmatprep.subr.bf16.mxu0 0
    %177 = vmatpush2.bf16.msra.mxu0 0
    %178 = vmatprep.subr.bf16.mxu0 0
    %179 = vmatpush2.bf16.msra.mxu0 0
    %180 = vmatprep.subr.bf16.mxu0 0
    %181 = vmatpush2.bf16.msra.mxu0 0
    %182 = vmatprep.subr.bf16.mxu0 0
    %183 = vmatpush2.bf16.msra.mxu0 0
    %184 = vmatprep.subr.bf16.mxu0 0
    %185 = vmatpush2.bf16.msra.mxu0 0
    %186 = vmatprep.mubr.bf16.mxu0 0
    %187 = vmatmul.mubr.bf16.gmra.mxu0 %v82
    %v188 = vpop.f32.mrf.mxu0
    %v189 = vadd.f32 %v104, %v188
    %v190 = vpop.f32.mrf.mxu0
    %v191 = vpop.f32.mrf.mxu0
    %v192 = vpop.f32.mrf.mxu0
    %193 = vdwg.mxu0
    %v194 = vmax.f32 %v189, 0.0
    %v195 = vpack.c.bf16 %v194, %v194
    %v196 = vld [vmem:[#allocation7] sm:$0xf]
    %v197 = vld [vmem:[#allocation7 + $0x4] sm:$0xf]
    %v198 = vld [vmem:[#allocation7 + $0x8] sm:$0xf]
    %v199 = vld [vmem:[#allocation7 + $0xc] sm:$0xf]
    %v200 = vld [vmem:[#allocation7 + $0x10] sm:$0xf]
    %v201 = vld [vmem:[#allocation7 + $0x14] sm:$0xf]
    %v202 = vld [vmem:[#allocation7 + $0x18] sm:$0xf]
    %v203 = vld [vmem:[#allocation7 + $0x1c] sm:$0xf]
    %v204 = vld [vmem:[#allocation7 + $0x20] sm:$0xf]
    %v205 = vld [vmem:[#allocation7 + $0x24] sm:$0xf]
    %v206 = vld [vmem:[#allocation7 + $0x28] sm:$0xf]
    %v207 = vld [vmem:[#allocation7 + $0x2c] sm:$0xf]
    %v208 = vld [vmem:[#allocation7 + $0x30] sm:$0xf]
    %v209 = vld [vmem:[#allocation7 + $0x34] sm:$0xf]
    %v210 = vld [vmem:[#allocation7 + $0x38] sm:$0xf]
    %v211 = vld [vmem:[#allocation7 + $0x3c] sm:$0xf]
    %v212 = vld [vmem:[%s4] sm:$0x1]
    %v214 = vlaneseq
    %v215 = vshrl.u32 %v214, 7
    %v216 = vsub.s32 0, %v215
    %v217 = vrot.slane %v212, %v216
    %v235 = vunpack.c.l.b16 %v196
    %v236 = vunpack.c.l.b16 %v197
    %v237 = vunpack.c.l.b16 %v198
    %v238 = vunpack.c.l.b16 %v199
    %v239 = vunpack.c.l.b16 %v200
    %v240 = vunpack.c.l.b16 %v201
    %v241 = vunpack.c.l.b16 %v202
    %v242 = vunpack.c.l.b16 %v203
    %v243 = vunpack.c.l.b16 %v204
    %v244 = vunpack.c.l.b16 %v205
    %v245 = vunpack.c.l.b16 %v206
    %v246 = vunpack.c.l.b16 %v207
    %v247 = vunpack.c.l.b16 %v208
    %v248 = vunpack.c.l.b16 %v209
    %v249 = vunpack.c.l.b16 %v210
    %v250 = vunpack.c.l.b16 %v211
    %v251 = vpack.c.b16 %v236, %v235
    %v252 = vpack.c.b16 %v238, %v237
    %v253 = vpack.c.b16 %v240, %v239
    %v254 = vpack.c.b16 %v242, %v241
    %v255 = vpack.c.b16 %v244, %v243
    %v256 = vpack.c.b16 %v246, %v245
    %v257 = vpack.c.b16 %v248, %v247
    %v258 = vpack.c.b16 %v250, %v249
    %267 = vmatprep.subr.bf16.mxu0 0
    %268 = vmatpush1.bf16.msra.mxu0 %v258
    %269 = vmatprep.subr.bf16.mxu0 0
    %270 = vmatpush1.bf16.msra.mxu0 %v257
    %271 = vmatprep.subr.bf16.mxu0 0
    %272 = vmatpush1.bf16.msra.mxu0 %v256
    %273 = vmatprep.subr.bf16.mxu0 0
    %274 = vmatpush1.bf16.msra.mxu0 %v255
    %275 = vmatprep.subr.bf16.mxu0 0
    %276 = vmatpush1.bf16.msra.mxu0 %v254
    %277 = vmatprep.subr.bf16.mxu0 0
    %278 = vmatpush1.bf16.msra.mxu0 %v253
    %279 = vmatprep.subr.bf16.mxu0 0
    %280 = vmatpush1.bf16.msra.mxu0 %v252
    %281 = vmatprep.subr.bf16.mxu0 0
    %282 = vmatpush1.bf16.msra.mxu0 %v251
    %283 = vmatprep.subr.bf16.mxu0 0
    %284 = vmatpush2.bf16.msra.mxu0 0
    %285 = vmatprep.subr.bf16.mxu0 0
    %286 = vmatpush2.bf16.msra.mxu0 0
    %287 = vmatprep.subr.bf16.mxu0 0
    %288 = vmatpush2.bf16.msra.mxu0 0
    %289 = vmatprep.subr.bf16.mxu0 0
    %290 = vmatpush2.bf16.msra.mxu0 0
    %291 = vmatprep.subr.bf16.mxu0 0
    %292 = vmatpush2.bf16.msra.mxu0 0
    %293 = vmatprep.subr.bf16.mxu0 0
    %294 = vmatpush2.bf16.msra.mxu0 0
    %295 = vmatprep.subr.bf16.mxu0 0
    %296 = vmatpush2.bf16.msra.mxu0 0
    %297 = vmatprep.subr.bf16.mxu0 0
    %298 = vmatpush2.bf16.msra.mxu0 0
    %299 = vmatprep.mubr.bf16.mxu0 0
    %300 = vmatmul.mubr.bf16.gmra.mxu0 %v195
    %v301 = vpop.f32.mrf.mxu0
    %v302 = vadd.f32 %v217, %v301
    %v303 = vpop.f32.mrf.mxu0
    %v304 = vpop.f32.mrf.mxu0
    %v305 = vpop.f32.mrf.mxu0
    %306 = vdwg.mxu0
    %v307 = vmax.f32 %v302, 0.0
    %v308 = vpack.c.bf16 %v307, %v307
    %v309 = vld [vmem:[#allocation8] sm:$0xff]
    %v310 = vld [vmem:[#allocation8 + $0x8] sm:$0xff]
    %v311 = vld [vmem:[#allocation8 + $0x10] sm:$0xff]
    %v312 = vld [vmem:[#allocation8 + $0x18] sm:$0xff]
    %v313 = vld [vmem:[#allocation8 + $0x20] sm:$0xff]
    %v314 = vld [vmem:[#allocation8 + $0x28] sm:$0xff]
    %v315 = vld [vmem:[#allocation8 + $0x30] sm:$0xff]
    %v316 = vld [vmem:[#allocation8 + $0x38] sm:$0xff]
    %v317 = vld [vmem:[#allocation8 + $0x40] sm:$0xff]
    %v318 = vld [vmem:[#allocation8 + $0x48] sm:$0xff]
    %v319 = vld [vmem:[#allocation8 + $0x50] sm:$0xff]
    %v320 = vld [vmem:[#allocation8 + $0x58] sm:$0xff]
    %v321 = vld [vmem:[#allocation8 + $0x60] sm:$0xff]
    %v322 = vld [vmem:[#allocation8 + $0x68] sm:$0xff]
    %v323 = vld [vmem:[#allocation8 + $0x70] sm:$0xff]
    %v324 = vld [vmem:[#allocation8 + $0x78] sm:$0xff]
    %v325 = vld [vmem:[%s6] sm:$0x3]
    %v327 = vlaneseq
    %v328 = vshrl.u32 %v327, 7
    %v329 = vsub.s32 0, %v328
    %v330 = vrot.slane %v325, %v329
    %v331 = vlaneseq
    %v332 = vshrl.u32 %v331, 7
    %v333 = vsub.s32 1, %v332
    %v334 = vrot.slane %v325, %v333
    %v353 = vunpack.c.l.b16 %v309
    %v354 = vunpack.c.h.b16 %v309
    %v355 = vunpack.c.l.b16 %v310
    %v356 = vunpack.c.h.b16 %v310
    %v357 = vunpack.c.l.b16 %v311
    %v358 = vunpack.c.h.b16 %v311
    %v359 = vunpack.c.l.b16 %v312
    %v360 = vunpack.c.h.b16 %v312
    %v361 = vunpack.c.l.b16 %v313
    %v362 = vunpack.c.h.b16 %v313
    %v363 = vunpack.c.l.b16 %v314
    %v364 = vunpack.c.h.b16 %v314
    %v365 = vunpack.c.l.b16 %v315
    %v366 = vunpack.c.h.b16 %v315
    %v367 = vunpack.c.l.b16 %v316
    %v368 = vunpack.c.h.b16 %v316
    %v369 = vunpack.c.l.b16 %v317
    %v370 = vunpack.c.h.b16 %v317
    %v371 = vunpack.c.l.b16 %v318
    %v372 = vunpack.c.h.b16 %v318
    %v373 = vunpack.c.l.b16 %v319
    %v374 = vunpack.c.h.b16 %v319
    %v375 = vunpack.c.l.b16 %v320
    %v376 = vunpack.c.h.b16 %v320
    %v377 = vunpack.c.l.b16 %v321
    %v378 = vunpack.c.h.b16 %v321
    %v379 = vunpack.c.l.b16 %v322
    %v380 = vunpack.c.h.b16 %v322
    %v381 = vunpack.c.l.b16 %v323
    %v382 = vunpack.c.h.b16 %v323
    %v383 = vunpack.c.l.b16 %v324
    %v384 = vunpack.c.h.b16 %v324
    %v385 = vpack.c.b16 %v355, %v353
    %v386 = vpack.c.b16 %v356, %v354
    %v387 = vpack.c.b16 %v359, %v357
    %v388 = vpack.c.b16 %v360, %v358
    %v389 = vpack.c.b16 %v363, %v361
    %v390 = vpack.c.b16 %v364, %v362
    %v391 = vpack.c.b16 %v367, %v365
    %v392 = vpack.c.b16 %v368, %v366
    %v393 = vpack.c.b16 %v371, %v369
    %v394 = vpack.c.b16 %v372, %v370
    %v395 = vpack.c.b16 %v375, %v373
    %v396 = vpack.c.b16 %v376, %v374
    %v397 = vpack.c.b16 %v379, %v377
    %v398 = vpack.c.b16 %v380, %v378
    %v399 = vpack.c.b16 %v383, %v381
    %v400 = vpack.c.b16 %v384, %v382
    %417 = vmatprep.subr.bf16.mxu0 %v400
    %418 = vmatpush1.bf16.msra.mxu0 %v399
    %419 = vmatprep.subr.bf16.mxu0 %v398
    %420 = vmatpush1.bf16.msra.mxu0 %v397
    %421 = vmatprep.subr.bf16.mxu0 %v396
    %422 = vmatpush1.bf16.msra.mxu0 %v395
    %423 = vmatprep.subr.bf16.mxu0 %v394
    %424 = vmatpush1.bf16.msra.mxu0 %v393
    %425 = vmatprep.subr.bf16.mxu0 %v392
    %426 = vmatpush1.bf16.msra.mxu0 %v391
    %427 = vmatprep.subr.bf16.mxu0 %v390
    %428 = vmatpush1.bf16.msra.mxu0 %v389
    %429 = vmatprep.subr.bf16.mxu0 %v388
    %430 = vmatpush1.bf16.msra.mxu0 %v387
    %431 = vmatprep.subr.bf16.mxu0 %v386
    %432 = vmatpush1.bf16.msra.mxu0 %v385
    %433 = vmatprep.subr.bf16.mxu0 0
    %434 = vmatpush2.bf16.msra.mxu0 0
    %435 = vmatprep.subr.bf16.mxu0 0
    %436 = vmatpush2.bf16.msra.mxu0 0
    %437 = vmatprep.subr.bf16.mxu0 0
    %438 = vmatpush2.bf16.msra.mxu0 0
    %439 = vmatprep.subr.bf16.mxu0 0
    %440 = vmatpush2.bf16.msra.mxu0 0
    %441 = vmatprep.subr.bf16.mxu0 0
    %442 = vmatpush2.bf16.msra.mxu0 0
    %443 = vmatprep.subr.bf16.mxu0 0
    %444 = vmatpush2.bf16.msra.mxu0 0
    %445 = vmatprep.subr.bf16.mxu0 0
    %446 = vmatpush2.bf16.msra.mxu0 0
    %447 = vmatprep.subr.bf16.mxu0 0
    %448 = vmatpush2.bf16.msra.mxu0 0
    %449 = vmatprep.mubr.bf16.mxu0 0
    %450 = vmatmul.mubr.bf16.gmra.mxu0 %v308
    %v451 = vpop.f32.mrf.mxu0
    %v452 = vadd.f32 %v330, %v451
    %v453 = vpop.f32.mrf.mxu0
    %v454 = vadd.f32 %v334, %v453
    %v455 = vpop.f32.mrf.mxu0
    %v456 = vpop.f32.mrf.mxu0
    %457 = vdwg.mxu0
    %v458 = vtanh.pop %v454
    %v459 = vadd.f32 %v458, 1.0
    %v460 = vmul.f32 %v459, 3.5
    %v461 = vadd.f32 %v460, -5.0
    %v462 = vmul.f32 %v461, 1.442695
    %v463 = vpow.pop %v462
    %464 = vst [vmem:[#allocation10] sm:$0xff] %v452
    %465 = vst [vmem:[#allocation10 + $0x8] sm:$0xff] %v463
    %v466 = vtanh.pop %v452
    %467 = vst [vmem:[#allocation10 + $0x10] sm:$0xff] %v466
    // Predicated region
    $region46: #{tpu_custom_call.1} parent=1 // pred_check
      _
    $region47: #{tpu_custom_call.1} parent=1 // pred_check_branch
      %469 = sbr.rel (0) target = $region49
    $region48: #{tpu_custom_call.1} parent=1 // pred_region
      %s471 = ssub.s32 384, 384
      %472 = vsyncadd [#allocation4], %s471
      %s474 = sshll.u32 [#allocation10], 4
      %s475 = int_to_ptr.vmem [resolvable:$true] %s474
      %477 = dma.vmem_to_hbm [thread:$0]  %s475, 384, %s7, [#allocation4]
    $region49: #{tpu_custom_call.1} parent=1 // pred_fallthru
      _
    // Predicated region
    $region50: #{tpu_custom_call.1} parent=1 // pred_check
      _
    $region51: #{tpu_custom_call.1} parent=1 // pred_check_branch
      %479 = sbr.rel (0) target = $region53
    $region52: #{tpu_custom_call.1} parent=1 // pred_region
      %480 = dma.done [#allocation4], 384
    $region53: #{tpu_custom_call.1} parent=1 // pred_fallthru
      _
    %481 = vsyncpa [#allocation3], 1
    %482 = vsyncpa [#allocation6], 1
    %483 = vsyncpa [#allocation9], 1
    %484 = vsyncpa [#allocation4], 1

</llo_original>
